<compile_context>
chip_gen: v7x
topology: tpu7x:2x2x1
jax: 0.10.0
libtpu: 0.0.40
codegen_flags: <defaults>
</compile_context>

<pallas_src>
import numpy as np
import jax
import jax.numpy as jnp
from jax.experimental import pallas as pl
from jax.experimental.pallas import tpu as pltpu

EPS = 1e-12  # F.normalize default eps (denominator clamp)


def _round_up(v, m):
    return (v + m - 1) // m * m


def _cosine_kernel(x_ref, w_ref, ws_ref, b_ref, o_ref, acc_ref, xsq_ref):
    # x_ref   : VMEM (TM, TK)   raw input tile
    # w_ref   : VMEM (TN, TK)   raw weight tile
    # ws_ref  : VMEM (1, TN)    tau / max(||w_row||, eps)  (precomputed)
    # b_ref   : VMEM (1, TN)    tau * bias                 (precomputed)
    # o_ref   : VMEM (TM, TN)   output logits
    # acc_ref : VMEM (TM, TN)   f32 matmul accumulator (scratch)
    # xsq_ref : VMEM (TM, 1)    f32 per-row sum-of-squares accumulator (scratch)
    k = pl.program_id(2)

    @pl.when(k == 0)
    def _init():
        acc_ref[...] = jnp.zeros_like(acc_ref)
        xsq_ref[...] = jnp.zeros_like(xsq_ref)

    x = x_ref[...]
    # Raw logits on the MXU: contract the feature axis of both operands.
    acc_ref[...] += jax.lax.dot_general(
        x, w_ref[...],
        dimension_numbers=(((1,), (1,)), ((), ())),
        preferred_element_type=jnp.float32,
    )
    # Accumulate per-row sum of squares of x for the post-matmul normalization.
    xf = x.astype(jnp.float32)
    xsq_ref[...] += jnp.sum(xf * xf, axis=-1, keepdims=True)

    @pl.when(k == pl.num_programs(2) - 1)
    def _finalize():
        # 1 / max(||x||, eps) == rsqrt(max(sumsq, eps^2))  (single EUP op, exact path)
        rx = jax.lax.rsqrt(jnp.maximum(xsq_ref[...], EPS * EPS))
        out = acc_ref[...] * rx * ws_ref[...] + b_ref[...]
        o_ref[...] = out.astype(o_ref.dtype)


def cosine_classifier(x, weight, bias, tau, *, tm=256, tn=256, tk=512):
    """tau * (normalize(x) @ normalize(weight).T + bias).

    x: [B, D], weight: [C, D], bias: [C] or None, tau: scalar -> [B, C] float32.
    """
    B, D = x.shape
    C = weight.shape[0]
    tau = jnp.asarray(tau, jnp.float32)

    # Hoisted, static per-class scale (tau folded in) and tau*bias, in f32.
    w32 = weight.astype(jnp.float32)
    w_norm = jnp.sqrt(jnp.sum(w32 * w32, axis=1))
    w_scale = tau / jnp.maximum(w_norm, EPS)                       # [C]
    if bias is None:
        b_scaled = jnp.zeros((C,), jnp.float32)
    else:
        b_scaled = tau * bias.astype(jnp.float32)                  # [C]

    # Tile sizes: lane-dense (multiple-of-128) class/feature tiles, 8-aligned rows.
    tm = min(tm, _round_up(B, 8))
    tn = min(tn, _round_up(C, 128))
    tk = min(tk, _round_up(D, 128))
    Bp, Cp, Dp = _round_up(B, tm), _round_up(C, tn), _round_up(D, tk)

    xp = jnp.pad(x, ((0, Bp - B), (0, Dp - D))) if (Bp != B or Dp != D) else x
    wp = jnp.pad(weight, ((0, Cp - C), (0, Dp - D))) if (Cp != C or Dp != D) else weight
    ws = jnp.pad(w_scale, (0, Cp - C)).reshape(1, Cp)
    bs = jnp.pad(b_scaled, (0, Cp - C)).reshape(1, Cp)

    grid = (Bp // tm, Cp // tn, Dp // tk)
    bytes_per = np.dtype(jnp.float32).itemsize

    out = pl.pallas_call(
        _cosine_kernel,
        out_shape=jax.ShapeDtypeStruct((Bp, Cp), jnp.float32),
        grid_spec=pltpu.PrefetchScalarGridSpec(
            num_scalar_prefetch=0,
            grid=grid,
            in_specs=[
                pl.BlockSpec((tm, tk), lambda i, j, k: (i, k)),    # x tile
                pl.BlockSpec((tn, tk), lambda i, j, k: (j, k)),    # W tile
                pl.BlockSpec((1, tn), lambda i, j, k: (0, j)),     # tau / ||w_row||
                pl.BlockSpec((1, tn), lambda i, j, k: (0, j)),     # tau * bias
            ],
            out_specs=pl.BlockSpec((tm, tn), lambda i, j, k: (i, j)),
            scratch_shapes=[
                pltpu.VMEM((tm, tn), jnp.float32),   # logits accumulator
                pltpu.VMEM((tm, 1), jnp.float32),    # x sum-of-squares accumulator
            ],
        ),
        compiler_params=pltpu.CompilerParams(
            dimension_semantics=("parallel", "parallel", "arbitrary"),
        ),
        cost_estimate=pl.CostEstimate(
            flops=2 * Bp * Cp * Dp + 2 * Bp * Dp,
            transcendentals=Bp,
            bytes_accessed=bytes_per * (Bp * Dp + Cp * Dp + Bp * Cp + 2 * Cp),
        ),
    )(xp, wp, ws, bs)

    if Bp != B or Cp != C:
        out = out[:B, :C]
    return out


def _reference(x, weight, bias, tau):
    xn = x / jnp.maximum(jnp.linalg.norm(x, axis=-1, keepdims=True), EPS)
    wn = weight / jnp.maximum(jnp.linalg.norm(weight, axis=-1, keepdims=True), EPS)
    b = 0.0 if bias is None else bias[None, :]
    return tau * (xn @ wn.T + b)


if __name__ == "__main__":
    key = jax.random.PRNGKey(0)
    k_x, k_w, k_b, k_x2, k_w2, k_b2 = jax.random.split(key, 6)

    # --- small shapes matching the module's natural usage ---
    in_features = 32
    out_features = 16
    batch = 8
    temperature = 10.0

    # Deterministic parameter init mimicking reset_parameter():
    # kaiming_normal_(a=sqrt(5)) -> std = sqrt(2/(1+5)) / sqrt(fan_in)
    fan_in = in_features
    std = np.sqrt(2.0 / (1.0 + 5.0)) / np.sqrt(fan_in)
    weight = std * jax.random.normal(k_w, (out_features, in_features), jnp.float32)
    bound = 1.0 / np.sqrt(fan_in)
    bias = jax.random.uniform(k_b, (out_features,), jnp.float32, -bound, bound)
    x = jax.random.normal(k_x, (batch, in_features), jnp.float32)

    out = cosine_classifier(x, weight, bias, temperature)
    out = jax.block_until_ready(out)
    ref = _reference(x, weight, bias, temperature)
    np.testing.assert_allclose(np.asarray(out), np.asarray(ref), rtol=1e-5, atol=1e-5)

    # --- secondary check exercising the multi-tile (grid) path with padding ---
    B2, D2, C2 = 24, 1024, 384   # grid = (1, 2, 2) with tn=256, tk=512; C padded to 512
    std2 = np.sqrt(2.0 / (1.0 + 5.0)) / np.sqrt(D2)
    w2 = std2 * jax.random.normal(k_w2, (C2, D2), jnp.float32)
    b2 = jax.random.uniform(k_b2, (C2,), jnp.float32, -1.0 / np.sqrt(D2), 1.0 / np.sqrt(D2))
    x2 = jax.random.normal(k_x2, (B2, D2), jnp.float32)

    out2 = jax.block_until_ready(cosine_classifier(x2, w2, b2, temperature))
    ref2 = _reference(x2, w2, b2, temperature)
    np.testing.assert_allclose(np.asarray(out2), np.asarray(ref2), rtol=1e-5, atol=1e-5)

    print("KERNEL_OK")
</pallas_src>

<mosaic_0001>
module attributes {stable_mosaic.version = 11 : i64} {
  func.func @_cosine_kernel(%arg0: i32, %arg1: i32, %arg2: i32, %arg3: memref<8x128xf32, #tpu.memory_space<vmem>>, %arg4: memref<128x128xf32, #tpu.memory_space<vmem>>, %arg5: memref<1x128xf32, #tpu.memory_space<vmem>>, %arg6: memref<1x128xf32, #tpu.memory_space<vmem>>, %arg7: memref<8x128xf32, #tpu.memory_space<vmem>>, %arg8: memref<8x128xf32, #tpu.memory_space<vmem>>, %arg9: memref<8x1xf32, #tpu.memory_space<vmem>>) attributes {dimension_semantics = [#tpu.dimension_semantics<parallel>, #tpu.dimension_semantics<parallel>, #tpu.dimension_semantics<arbitrary>], iteration_bounds = array<i64: 1, 1, 1>, scalar_prefetch = 0 : i64, scratch_operands = 2 : i64, tpu.core_type = #tpu.core_type<tc>, window_params = [{transform_indices = @transform_0, window_bounds = array<i64: 8, 128>}, {transform_indices = @transform_1, window_bounds = array<i64: 128, 128>}, {transform_indices = @transform_2, window_bounds = array<i64: 1, 128>}, {transform_indices = @transform_3, window_bounds = array<i64: 1, 128>}, {transform_indices = @transform_4, window_bounds = array<i64: 8, 128>}]} {
    %c0_i32 = arith.constant 0 : i32
    %0 = arith.cmpi eq, %arg2, %c0_i32 : i32
    %1 = arith.extui %0 : i1 to i32
    %c0_i32_0 = arith.constant 0 : i32
    %2 = arith.cmpi ne, %1, %c0_i32_0 : i32
    scf.if %2 {
      %cst_15 = arith.constant 0.000000e+00 : f32
      %18 = vector.broadcast %cst_15 : f32 to vector<8x128xf32>
      %c0_16 = arith.constant 0 : index
      %c0_17 = arith.constant 0 : index
      %19 = vector.load %arg8[%c0_16, %c0_17] : memref<8x128xf32, #tpu.memory_space<vmem>>, vector<8x128xf32>
      tpu.vector_store %arg8[%c0_16, %c0_17], %18 {strides = array<i32>} : memref<8x128xf32, #tpu.memory_space<vmem>>, vector<8x128xf32>,
      %cst_18 = arith.constant 0.000000e+00 : f32
      %20 = vector.broadcast %cst_18 : f32 to vector<8x1xf32>
      %c0_19 = arith.constant 0 : index
      %c0_20 = arith.constant 0 : index
      %21 = vector.load %arg9[%c0_19, %c0_20] : memref<8x1xf32, #tpu.memory_space<vmem>>, vector<8x1xf32>
      tpu.vector_store %arg9[%c0_19, %c0_20], %20 {strides = array<i32>} : memref<8x1xf32, #tpu.memory_space<vmem>>, vector<8x1xf32>,
    } else {
    }
    %c0 = arith.constant 0 : index
    %c0_1 = arith.constant 0 : index
    %3 = vector.load %arg3[%c0, %c0_1] : memref<8x128xf32, #tpu.memory_space<vmem>>, vector<8x128xf32>
    %c0_2 = arith.constant 0 : index
    %c0_3 = arith.constant 0 : index
    %4 = vector.load %arg8[%c0_2, %c0_3] : memref<8x128xf32, #tpu.memory_space<vmem>>, vector<8x128xf32>
    %c0_4 = arith.constant 0 : index
    %c0_5 = arith.constant 0 : index
    %5 = vector.load %arg4[%c0_4, %c0_5] : memref<128x128xf32, #tpu.memory_space<vmem>>, vector<128x128xf32>
    %cst = arith.constant dense<0.000000e+00> : vector<8x128xf32>
    %6 = tpu.matmul %3, %5, %cst {dimension_numbers = #tpu.dot_dimension_numbers<[1], [1], [0], [0], [0, 0, 1, 0], [], []>} : vector<8x128xf32>, vector<128x128xf32>, vector<8x128xf32> -> vector<8x128xf32>
    %7 = arith.addf %4, %6 : vector<8x128xf32>
    %c0_6 = arith.constant 0 : index
    %c0_7 = arith.constant 0 : index
    %8 = vector.load %arg8[%c0_6, %c0_7] : memref<8x128xf32, #tpu.memory_space<vmem>>, vector<8x128xf32>
    tpu.vector_store %arg8[%c0_6, %c0_7], %7 {strides = array<i32>} : memref<8x128xf32, #tpu.memory_space<vmem>>, vector<8x128xf32>,
    %c0_8 = arith.constant 0 : index
    %c0_9 = arith.constant 0 : index
    %9 = vector.load %arg9[%c0_8, %c0_9] : memref<8x1xf32, #tpu.memory_space<vmem>>, vector<8x1xf32>
    %10 = arith.mulf %3, %3 : vector<8x128xf32>
    %cst_10 = arith.constant dense<0.000000e+00> : vector<8xf32>
    %11 = vector.multi_reduction <add>, %10, %cst_10 [1] : vector<8x128xf32> to vector<8xf32>
    %12 = vector.shape_cast %11 : vector<8xf32> to vector<8x1xf32>
    %13 = arith.addf %9, %12 : vector<8x1xf32>
    %c0_11 = arith.constant 0 : index
    %c0_12 = arith.constant 0 : index
    %14 = vector.load %arg9[%c0_11, %c0_12] : memref<8x1xf32, #tpu.memory_space<vmem>>, vector<8x1xf32>
    tpu.vector_store %arg9[%c0_11, %c0_12], %13 {strides = array<i32>} : memref<8x1xf32, #tpu.memory_space<vmem>>, vector<8x1xf32>,
    %c0_i32_13 = arith.constant 0 : i32
    %15 = arith.cmpi eq, %arg2, %c0_i32_13 : i32
    %16 = arith.extui %15 : i1 to i32
    %c0_i32_14 = arith.constant 0 : i32
    %17 = arith.cmpi ne, %16, %c0_i32_14 : i32
    scf.if %17 {
      %c0_15 = arith.constant 0 : index
      %c0_16 = arith.constant 0 : index
      %18 = vector.load %arg9[%c0_15, %c0_16] : memref<8x1xf32, #tpu.memory_space<vmem>>, vector<8x1xf32>
      %cst_17 = arith.constant 1.000000e-24 : f32
      %19 = vector.broadcast %cst_17 : f32 to vector<8x1xf32>
      %20 = arith.maximumf %18, %19 : vector<8x1xf32>
      %21 = math.rsqrt %20 : vector<8x1xf32>
      %c0_18 = arith.constant 0 : index
      %c0_19 = arith.constant 0 : index
      %22 = vector.load %arg8[%c0_18, %c0_19] : memref<8x128xf32, #tpu.memory_space<vmem>>, vector<8x128xf32>
      %23 = vector.broadcast %21 : vector<8x1xf32> to vector<8x128xf32>
      %24 = arith.mulf %22, %23 : vector<8x128xf32>
      %c0_20 = arith.constant 0 : index
      %c0_21 = arith.constant 0 : index
      %25 = vector.load %arg5[%c0_20, %c0_21] : memref<1x128xf32, #tpu.memory_space<vmem>>, vector<1x128xf32>
      %26 = vector.broadcast %25 : vector<1x128xf32> to vector<8x128xf32>
      %27 = arith.mulf %24, %26 : vector<8x128xf32>
      %c0_22 = arith.constant 0 : index
      %c0_23 = arith.constant 0 : index
      %28 = vector.load %arg6[%c0_22, %c0_23] : memref<1x128xf32, #tpu.memory_space<vmem>>, vector<1x128xf32>
      %29 = vector.broadcast %28 : vector<1x128xf32> to vector<8x128xf32>
      %30 = arith.addf %27, %29 : vector<8x128xf32>
      %c0_24 = arith.constant 0 : index
      %c0_25 = arith.constant 0 : index
      %31 = vector.load %arg7[%c0_24, %c0_25] : memref<8x128xf32, #tpu.memory_space<vmem>>, vector<8x128xf32>
      tpu.vector_store %arg7[%c0_24, %c0_25], %30 {strides = array<i32>} : memref<8x128xf32, #tpu.memory_space<vmem>>, vector<8x128xf32>,
    } else {
    }
    return
  }
  func.func @transform_0(%arg0: i32, %arg1: i32, %arg2: i32) -> (i32, i32) {
    %c0_i32 = arith.constant 0 : i32
    return %arg0, %arg2 : i32, i32
  }
  func.func @transform_1(%arg0: i32, %arg1: i32, %arg2: i32) -> (i32, i32) {
    %c0_i32 = arith.constant 0 : i32
    return %arg1, %arg2 : i32, i32
  }
  func.func @transform_2(%arg0: i32, %arg1: i32, %arg2: i32) -> (i32, i32) {
    %c0_i32 = arith.constant 0 : i32
    %c0_i32_0 = arith.constant 0 : i32
    return %c0_i32, %arg1 : i32, i32
  }
  func.func @transform_3(%arg0: i32, %arg1: i32, %arg2: i32) -> (i32, i32) {
    %c0_i32 = arith.constant 0 : i32
    %c0_i32_0 = arith.constant 0 : i32
    return %c0_i32, %arg1 : i32, i32
  }
  func.func @transform_4(%arg0: i32, %arg1: i32, %arg2: i32) -> (i32, i32) {
    %c0_i32 = arith.constant 0 : i32
    return %arg0, %arg1 : i32, i32
  }
}

</mosaic_0001>

<llo_original>
// kernel: tpu_custom_call.1
$region0: #{tpu_custom_call.1}
  #allocation0 [shape = 'u32[]', space=smem, size = 0x4, offset = 0x4, fixed_abs, tag = 'smem constant byte address 0x4 - core index']
  #allocation1 [shape = 'u32[144,128]{1,0:T(1,128)}', space=vmem, size = 0x12000, scoped, tag = 'internal scratch']
  #allocation2 [shape = 'f32[8,128]{1,0:T(8,128)}', space=vmem, size = 0x1000, scoped, tag = 'scratch operand']
  #allocation3 [shape = 'f32[8,1]{1,0:T(8,128)}', space=vmem, size = 0x1000, scoped, tag = 'scratch operand']
  %s0 = inlined_call_operand.hbm [shape: f32[8,128], index: 0, kind: input, shape index: {}]
  %s1 = inlined_call_operand.hbm [shape: f32[128,128], index: 1, kind: input, shape index: {}]
  %s2 = inlined_call_operand.vmem [shape: f32[1,128], index: 2, kind: input, shape index: {}]
  %s3 = inlined_call_operand.vmem [shape: f32[1,128], index: 3, kind: input, shape index: {}]
  %s4 = inlined_call_operand.hbm [shape: f32[8,128], index: 4, kind: output, shape index: {}]
  %s5 = sld [smem:[#allocation0]]
  $region42: #{tpu_custom_call.1} parent=0
    _
  %s7 = ssub.s32 1, %s5
  %s8 = scalar_select 0, %s7, %s5
  $region1: #{tpu_custom_call.1} parent=0
    #allocation4 [shape = 'u8[4096]{0}', space=vmem, size = 0x1000, scoped, tag = 'input window, operand 0, single buffered']
    #allocation5 [shape = 's32[1]{0}', space=sflag, size = 0x4, scoped, tag = 'scoped memory for tpu_custom_call.1']
    #allocation6 [shape = 's32[1]{0}', space=sflag, size = 0x4, scoped, tag = 'scoped memory for tpu_custom_call.1']
    #allocation7 [shape = 'u8[65536]{0}', space=vmem, size = 0x10000, scoped, tag = 'input window, operand 1, single buffered']
    #allocation8 [shape = 's32[1]{0}', space=sflag, size = 0x4, scoped, tag = 'scoped memory for tpu_custom_call.1']
    #allocation9 [shape = 'u8[4096]{0}', space=vmem, size = 0x1000, scoped, tag = 'output window, operand 0, single buffered']
    %9 = vsyncpa [#allocation5], 0
    %10 = vsyncpa [#allocation8], 0
    %11 = vsyncpa [#allocation6], 0
    // Predicated region
    $region2: #{tpu_custom_call.1} parent=1 // pred_check
      _
    $region3: #{tpu_custom_call.1} parent=1 // pred_check_branch
      %13 = sbr.rel (0) target = $region5
    $region4: #{tpu_custom_call.1} parent=1 // pred_region
      %s15 = ssub.s32 128, 128
      %16 = vsyncadd [#allocation5], %s15
      %s18 = sshll.u32 [#allocation4], 4
      %s19 = int_to_ptr.vmem [resolvable:$true] %s18
      %21 = dma.hbm_to_vmem [thread:$0]  %s0, 128, %s19, [#allocation5]
    $region5: #{tpu_custom_call.1} parent=1 // pred_fallthru
      _
    // Predicated region
    $region6: #{tpu_custom_call.1} parent=1 // pred_check
      _
    $region7: #{tpu_custom_call.1} parent=1 // pred_check_branch
      %23 = sbr.rel (0) target = $region9
    $region8: #{tpu_custom_call.1} parent=1 // pred_region
      %s25 = ssub.s32 2048, 2048
      %26 = vsyncadd [#allocation8], %s25
      %s27 = sshll.u32 [#allocation7], 4
      %s28 = int_to_ptr.vmem [resolvable:$true] %s27
      %33 = dma.hbm_to_vmem [thread:$0]  %s1, 2048, %s28, [#allocation8], 128, 128, 8
    $region9: #{tpu_custom_call.1} parent=1 // pred_fallthru
      _
    // Predicated region
    $region10: #{tpu_custom_call.1} parent=1 // pred_check
      _
    $region11: #{tpu_custom_call.1} parent=1 // pred_check_branch
      %35 = sbr.rel (0) target = $region13
    $region12: #{tpu_custom_call.1} parent=1 // pred_region
      _
    $region13: #{tpu_custom_call.1} parent=1 // pred_fallthru
      _
    // Predicated region
    $region14: #{tpu_custom_call.1} parent=1 // pred_check
      _
    $region15: #{tpu_custom_call.1} parent=1 // pred_check_branch
      %37 = sbr.rel (0) target = $region17
    $region16: #{tpu_custom_call.1} parent=1 // pred_region
      _
    $region17: #{tpu_custom_call.1} parent=1 // pred_fallthru
      _
    // Predicated region
    $region18: #{tpu_custom_call.1} parent=1 // pred_check
      _
    $region19: #{tpu_custom_call.1} parent=1 // pred_check_branch
      %39 = sbr.rel (0) target = $region21
    $region20: #{tpu_custom_call.1} parent=1 // pred_region
      %40 = dma.done [#allocation5], 128
    $region21: #{tpu_custom_call.1} parent=1 // pred_fallthru
      _
    // Predicated region
    $region22: #{tpu_custom_call.1} parent=1 // pred_check
      _
    $region23: #{tpu_custom_call.1} parent=1 // pred_check_branch
      %42 = sbr.rel (0) target = $region25
    $region24: #{tpu_custom_call.1} parent=1 // pred_region
      %43 = dma.done [#allocation8], 2048
    $region25: #{tpu_custom_call.1} parent=1 // pred_fallthru
      _
    %p44 = scmp.eq.s32.totalorder 0, 0
    // Predicated region
    $region26: #{tpu_custom_call.1} parent=1 // pred_check
      %p45 = pneg %p44
    $region27: #{tpu_custom_call.1} parent=1 // pred_check_branch
      %47 = sbr.rel (%p45) target = $region29
    $region28: #{tpu_custom_call.1} parent=1 // pred_region
      %48 = vst [vmem:[#allocation2] sm:$0xff] 0.0
      %vm49 = vcmask 7168
      %50 = vst.msk [vmem:[#allocation3] sm:$0xff] %vm49, 0.0
    $region29: #{tpu_custom_call.1} parent=1 // pred_fallthru
      _
    %v51 = vld [vmem:[#allocation4] sm:$0xff]
    %v52 = vld [vmem:[#allocation2] sm:$0xff]
    %v53 = vld [vmem:[#allocation7] sm:$0xff]
    %v54 = vld [vmem:[#allocation7 + $0x8] sm:$0xff]
    %v55 = vld [vmem:[#allocation7 + $0x10] sm:$0xff]
    %v56 = vld [vmem:[#allocation7 + $0x18] sm:$0xff]
    %v57 = vld [vmem:[#allocation7 + $0x20] sm:$0xff]
    %v58 = vld [vmem:[#allocation7 + $0x28] sm:$0xff]
    %v59 = vld [vmem:[#allocation7 + $0x30] sm:$0xff]
    %v60 = vld [vmem:[#allocation7 + $0x38] sm:$0xff]
    %v61 = vld [vmem:[#allocation7 + $0x40] sm:$0xff]
    %v62 = vld [vmem:[#allocation7 + $0x48] sm:$0xff]
    %v63 = vld [vmem:[#allocation7 + $0x50] sm:$0xff]
    %v64 = vld [vmem:[#allocation7 + $0x58] sm:$0xff]
    %v65 = vld [vmem:[#allocation7 + $0x60] sm:$0xff]
    %v66 = vld [vmem:[#allocation7 + $0x68] sm:$0xff]
    %v67 = vld [vmem:[#allocation7 + $0x70] sm:$0xff]
    %v68 = vld [vmem:[#allocation7 + $0x78] sm:$0xff]
    %69 = vmatprep.subr.mxu0 0.0
    %70 = vmatpush1.xpose.msra.mxu0 %v53
    %71 = vmatprep.subr.mxu0 0.0
    %72 = vmatpush1.xpose.msra.mxu0 %v54
    %73 = vmatprep.subr.mxu0 0.0
    %74 = vmatpush1.xpose.msra.mxu0 %v55
    %75 = vmatprep.subr.mxu0 0.0
    %76 = vmatpush1.xpose.msra.mxu0 %v56
    %77 = vmatprep.subr.mxu0 0.0
    %78 = vmatpush1.xpose.msra.mxu0 %v57
    %79 = vmatprep.subr.mxu0 0.0
    %80 = vmatpush1.xpose.msra.mxu0 %v58
    %81 = vmatprep.subr.mxu0 0.0
    %82 = vmatpush1.xpose.msra.mxu0 %v59
    %83 = vmatprep.subr.mxu0 0.0
    %84 = vmatpush1.xpose.msra.mxu0 %v60
    %85 = vmatprep.subr.mxu0 0.0
    %86 = vmatpush1.xpose.msra.mxu0 %v61
    %87 = vmatprep.subr.mxu0 0.0
    %88 = vmatpush1.xpose.msra.mxu0 %v62
    %89 = vmatprep.subr.mxu0 0.0
    %90 = vmatpush1.xpose.msra.mxu0 %v63
    %91 = vmatprep.subr.mxu0 0.0
    %92 = vmatpush1.xpose.msra.mxu0 %v64
    %93 = vmatprep.subr.mxu0 0.0
    %94 = vmatpush1.xpose.msra.mxu0 %v65
    %95 = vmatprep.subr.mxu0 0.0
    %96 = vmatpush1.xpose.msra.mxu0 %v66
    %97 = vmatprep.subr.mxu0 0.0
    %98 = vmatpush1.xpose.msra.mxu0 %v67
    %99 = vmatprep.subr.mxu0 0.0
    %100 = vmatpush1.xpose.msra.mxu0 %v68
    %101 = vmatprep.subr.mxu0 0.0
    %102 = vmatpush1.xpose.msra.mxu0 0.0
    %103 = vmatprep.subr.mxu0 0.0
    %104 = vmatpush1.xpose.msra.mxu0 0.0
    %105 = vmatprep.subr.mxu0 0.0
    %106 = vmatpush1.xpose.msra.mxu0 0.0
    %107 = vmatprep.subr.mxu0 0.0
    %108 = vmatpush1.xpose.msra.mxu0 0.0
    %109 = vmatprep.subr.mxu0 0.0
    %110 = vmatpush1.xpose.msra.mxu0 0.0
    %111 = vmatprep.subr.mxu0 0.0
    %112 = vmatpush1.xpose.msra.mxu0 0.0
    %113 = vmatprep.subr.mxu0 0.0
    %114 = vmatpush1.xpose.msra.mxu0 0.0
    %115 = vmatprep.subr.mxu0 0.0
    %116 = vmatpush1.xpose.msra.mxu0 0.0
    %117 = vmatprep.subr.mxu0 0.0
    %118 = vmatpush1.xpose.msra.mxu0 0.0
    %119 = vmatprep.subr.mxu0 0.0
    %120 = vmatpush1.xpose.msra.mxu0 0.0
    %121 = vmatprep.subr.mxu0 0.0
    %122 = vmatpush1.xpose.msra.mxu0 0.0
    %123 = vmatprep.subr.mxu0 0.0
    %124 = vmatpush1.xpose.msra.mxu0 0.0
    %125 = vmatprep.subr.mxu0 0.0
    %126 = vmatpush1.xpose.msra.mxu0 0.0
    %127 = vmatprep.subr.mxu0 0.0
    %128 = vmatpush1.xpose.msra.mxu0 0.0
    %129 = vmatprep.subr.mxu0 0.0
    %130 = vmatpush1.xpose.msra.mxu0 0.0
    %131 = vmatprep.subr.mxu0 0.0
    %132 = vmatpush1.xpose.msra.mxu0 0.0
    %133 = vmatprep.mubr.f32.mxu0 0.0
    %134 = vmatmul.mubr.f32.gmra.mrb[0].mxu0 %v51
    %v135 = vpop.f32.mrb[0].mxu0
    %v136 = vadd.f32 0.0, %v135
    %v137 = vpop.f32.mrb[0].mxu0
    %138 = vdwg.mxu0
    %v139 = vadd.f32 %v52, %v136
    %140 = vst [vmem:[#allocation2] sm:$0xff] %v139
    %v141 = vld [vmem:[#allocation3] sm:$0xff]
    %v142 = vmul.f32 %v51, %v51
    %143 = vadd.xlane.f32.xlu0 %v142
    %v144 = vpop.xlane.xlu0 %143
    %v145 = vadd.f32 %v141, %v144
    %vm146 = vcmask 7168
    %147 = vst.msk [vmem:[#allocation3] sm:$0xff] %vm146, %v145
    // Predicated region
    $region30: #{tpu_custom_call.1} parent=1 // pred_check
      %p148 = pneg %p44
    $region31: #{tpu_custom_call.1} parent=1 // pred_check_branch
      %150 = sbr.rel (%p148) target = $region33
    $region32: #{tpu_custom_call.1} parent=1 // pred_region
      %v151 = vld [vmem:[#allocation3] sm:$0xff]
      %v152 = vmax.f32 %v151, 1e-24
      %v153 = vrsqrt.pop %v152
      %v154 = vld [vmem:[#allocation2] sm:$0xff]
      %156 = vset.pattern.permute.xlu0 0
      %157 = vperm.xlu0 %156, %v153
      %v158 = vpop.permute.xlu0 %157
      %v160 = vmul.f32 %v154, %v158
      %v161 = vld [vmem:[%s2] sm:$0x1]
      %v163 = vlaneseq
      %v164 = vshrl.u32 %v163, 7
      %v165 = vsub.s32 0, %v164
      %v166 = vrot.slane %v161, %v165
      %v168 = vmul.f32 %v160, %v166
      %v169 = vld [vmem:[%s3] sm:$0x1]
      %v171 = vlaneseq
      %v172 = vshrl.u32 %v171, 7
      %v173 = vsub.s32 0, %v172
      %v174 = vrot.slane %v169, %v173
      %v176 = vadd.f32 %v168, %v174
      %177 = vst [vmem:[#allocation9] sm:$0xff] %v176
    $region33: #{tpu_custom_call.1} parent=1 // pred_fallthru
      _
    // Predicated region
    $region34: #{tpu_custom_call.1} parent=1 // pred_check
      _
    $region35: #{tpu_custom_call.1} parent=1 // pred_check_branch
      %179 = sbr.rel (0) target = $region37
    $region36: #{tpu_custom_call.1} parent=1 // pred_region
      %s181 = ssub.s32 128, 128
      %182 = vsyncadd [#allocation6], %s181
      %s184 = sshll.u32 [#allocation9], 4
      %s185 = int_to_ptr.vmem [resolvable:$true] %s184
      %187 = dma.vmem_to_hbm [thread:$0]  %s185, 128, %s4, [#allocation6]
    $region37: #{tpu_custom_call.1} parent=1 // pred_fallthru
      _
    // Predicated region
    $region38: #{tpu_custom_call.1} parent=1 // pred_check
      _
    $region39: #{tpu_custom_call.1} parent=1 // pred_check_branch
      %189 = sbr.rel (0) target = $region41
    $region40: #{tpu_custom_call.1} parent=1 // pred_region
      %190 = dma.done [#allocation6], 128
    $region41: #{tpu_custom_call.1} parent=1 // pred_fallthru
      _
    %191 = vsyncpa [#allocation5], 1
    %192 = vsyncpa [#allocation8], 1
    %193 = vsyncpa [#allocation6], 1

</llo_original>
